<compile_context>
chip_gen: v6e
topology: v6e:2x2x1
jax: 0.10.0
libtpu: 0.0.40
codegen_flags: <defaults>
</compile_context>

<pallas_src>
import functools

import jax
import jax.numpy as jnp
from jax.experimental import pallas as pl
from jax.experimental.pallas import tpu as pltpu


LANE = 128        # hardware lane width
MAX_TM = 32768    # rays per grid step; ~6 MiB double-buffered VMEM total


def _round_up(x, m):
    return ((x + m - 1) // m) * m


def _nerf_finalize_kernel(bound, slab_ref, img_ref, bg_ref, out_ref):
    # slab rows: 0-2 rays_o, 3-5 rays_d, 6 weights_sum, 7 depth_acc
    slab = slab_ref[...]                              # (8, TM) float32
    ro = slab[0:3, :]
    rd = slab[3:6, :]
    ws = slab[6:7, :]
    dacc = slab[7:8, :]

    # --- near_far_from_bound (type='cube') ------------------------------------
    inv_d = pl.reciprocal(rd + 1e-15)                 # exact; 1 recip + 2 muls
    tmin = (-bound - ro) * inv_d                      # (3, TM)
    tmax = (bound - ro) * inv_d                       # (3, TM)
    near = jnp.max(jnp.minimum(tmin, tmax), axis=0, keepdims=True)   # (1, TM)
    far = jnp.min(jnp.maximum(tmin, tmax), axis=0, keepdims=True)    # (1, TM)
    invalid = far < near
    near = jnp.where(invalid, 1e9, near)
    far = jnp.where(invalid, 1e9, far)
    near = jnp.maximum(near, 0.05)

    # --- run_cuda inference finalization --------------------------------------
    depth = (dacc - near) * pl.reciprocal(far - near)            # (1, TM)
    one_m_ws = 1.0 - ws                                          # (1, TM)
    img = img_ref[...]                                           # (3, TM)

    # single fused [depth; r; g; b] block -> ONE full-block store
    out_ref[...] = jnp.concatenate(
        [
            depth,
            img[0:1, :] + one_m_ws * bg_ref[0],
            img[1:2, :] + one_m_ws * bg_ref[1],
            img[2:3, :] + one_m_ws * bg_ref[2],
        ],
        axis=0,
    )


@functools.partial(jax.jit, static_argnames=("bound",))
def nerf_render_finalize(rays_o, rays_d, weights_sum, depth_acc, image_acc,
                         bg_color, bound):
    """rays_o, rays_d: (B, N, 3); weights_sum, depth_acc: (B, N);
    image_acc: (B, N, 3); bg_color: (3,); bound: python float (static).
    Returns (depth (B,N), image (B,N,3)) — the run_cuda inference-branch outputs."""
    B, N, _ = rays_o.shape
    M = B * N

    # Grid sizing: even number of steps >= 2 (so both v7x TCs get work), lane tile
    # a multiple of 128, capped at MAX_TM.
    m128 = _round_up(M, LANE)
    steps = max(2, -(-m128 // MAX_TM))
    if steps % 2:
        steps += 1
    TM = _round_up(-(-m128 // steps), LANE)
    M_pad = TM * steps
    pad = M_pad - M

    # One fused packing pass: (8, M) slab = [ro.T; rd.T; weights_sum; depth_acc]
    ro = rays_o.reshape(M, 3).astype(jnp.float32)
    rd = rays_d.reshape(M, 3).astype(jnp.float32)
    slab = jnp.concatenate(
        [
            jnp.transpose(ro),
            jnp.transpose(rd),
            weights_sum.reshape(1, M).astype(jnp.float32),
            depth_acc.reshape(1, M).astype(jnp.float32),
        ],
        axis=0,
    )
    # zero-padded lanes stay finite: rd=0 -> inv_d=1e15, all downstream math finite
    slab = jnp.pad(slab, ((0, 0), (0, pad)))

    img = jnp.pad(
        jnp.transpose(image_acc.reshape(M, 3).astype(jnp.float32)),
        ((0, 0), (0, pad)))
    bg = bg_color.astype(jnp.float32).reshape(3)

    grid = (steps,)
    out = pl.pallas_call(
        functools.partial(_nerf_finalize_kernel, float(bound)),
        grid=grid,
        in_specs=[
            pl.BlockSpec((8, TM), lambda i: (0, i)),                      # packed slab
            pl.BlockSpec((3, TM), lambda i: (0, i)),                      # image_acc
            pl.BlockSpec(memory_space=pltpu.MemorySpace.SMEM),            # bg_color
        ],
        out_specs=pl.BlockSpec((4, TM), lambda i: (0, i)),
        out_shape=jax.ShapeDtypeStruct((4, M_pad), jnp.float32),          # [depth; rgb]
        compiler_params=pltpu.CompilerParams(
            dimension_semantics=("parallel",)),
    )(slab, img, bg)

    depth = out[0, :M].reshape(B, N)
    image = jnp.transpose(out[1:4, :M]).reshape(B, N, 3)
    return depth, image


# --------------------------- pure-JAX reference --------------------------------
def _reference(rays_o, rays_d, weights_sum, depth_acc, image_acc, bg_color, bound):
    tmin = (-bound - rays_o) / (rays_d + 1e-15)
    tmax = (bound - rays_o) / (rays_d + 1e-15)
    near = jnp.max(jnp.where(tmin < tmax, tmin, tmax), axis=-1)
    far = jnp.min(jnp.where(tmin > tmax, tmin, tmax), axis=-1)
    mask = far < near
    near = jnp.where(mask, 1e9, near)
    far = jnp.where(mask, 1e9, far)
    near = jnp.maximum(near, 0.05)
    image = image_acc + (1.0 - weights_sum)[..., None] * bg_color
    depth = (depth_acc - near) / (far - near)
    return depth, image


# TODO(synk): raymarching.march_rays / composite_rays / compact_rays (CUDA extension),
#             the abstract NeRF MLP forward/density (exps_code), and update_extra_state
#             (depends on the abstract density MLP) are not translatable here.

if __name__ == "__main__":
    key = jax.random.PRNGKey(0)
    B, N = 2, 16
    k1, k2, k3, k4, k5 = jax.random.split(key, 5)

    rays_o = jax.random.uniform(k1, (B, N, 3), jnp.float32, -0.5, 0.5)
    rays_d = jax.random.normal(k2, (B, N, 3), jnp.float32)
    rays_d = rays_d / jnp.linalg.norm(rays_d, axis=-1, keepdims=True)
    weights_sum = jax.random.uniform(k3, (B, N), jnp.float32, 0.0, 1.0)
    depth_acc = jax.random.uniform(k4, (B, N), jnp.float32, 0.1, 2.0)
    image_acc = jax.random.uniform(k5, (B, N, 3), jnp.float32, 0.0, 1.0)
    bg_color = jnp.ones((3,), jnp.float32)
    bound = 1.0

    depth, image = nerf_render_finalize(
        rays_o, rays_d, weights_sum, depth_acc, image_acc, bg_color, bound)
    jax.block_until_ready((depth, image))

    d_ref, i_ref = _reference(
        rays_o, rays_d, weights_sum, depth_acc, image_acc, bg_color, bound)

    assert depth.shape == (B, N) and image.shape == (B, N, 3)
    assert jnp.allclose(depth, d_ref, rtol=1e-5, atol=1e-5)
    assert jnp.allclose(image, i_ref, rtol=1e-5, atol=1e-5)

    print("KERNEL_OK")
</pallas_src>

<mosaic_0001>
module attributes {stable_mosaic.version = 11 : i64} {
  func.func @_nerf_finalize_kernel(%arg0: i32, %arg1: memref<8x128xf32, #tpu.memory_space<vmem>>, %arg2: memref<3x128xf32, #tpu.memory_space<vmem>>, %arg3: memref<3xf32, #tpu.memory_space<smem>>, %arg4: memref<4x128xf32, #tpu.memory_space<vmem>>) attributes {dimension_semantics = [#tpu.dimension_semantics<parallel>], iteration_bounds = array<i64: 2>, scalar_prefetch = 0 : i64, scratch_operands = 0 : i64, tpu.core_type = #tpu.core_type<tc>, window_params = [{transform_indices = @transform_0, window_bounds = array<i64: 8, 128>}, {transform_indices = @transform_1, window_bounds = array<i64: 3, 128>}, {transform_indices = @transform_2, window_bounds = array<i64: 3>}, {transform_indices = @transform_3, window_bounds = array<i64: 4, 128>}]} {
    %c0 = arith.constant 0 : index
    %c0_0 = arith.constant 0 : index
    %0 = vector.load %arg1[%c0, %c0_0] : memref<8x128xf32, #tpu.memory_space<vmem>>, vector<8x128xf32>
    %1 = vector.extract_strided_slice %0 {offsets = [0, 0], sizes = [3, 128], strides = [1, 1]} : vector<8x128xf32> to vector<3x128xf32>
    %2 = vector.extract_strided_slice %0 {offsets = [3, 0], sizes = [3, 128], strides = [1, 1]} : vector<8x128xf32> to vector<3x128xf32>
    %3 = vector.extract_strided_slice %0 {offsets = [6, 0], sizes = [1, 128], strides = [1, 1]} : vector<8x128xf32> to vector<1x128xf32>
    %4 = vector.extract_strided_slice %0 {offsets = [7, 0], sizes = [1, 128], strides = [1, 1]} : vector<8x128xf32> to vector<1x128xf32>
    %cst = arith.constant 1.000000e-15 : f32
    %5 = vector.broadcast %cst : f32 to vector<3x128xf32>
    %6 = arith.addf %2, %5 : vector<3x128xf32>
    %7 = tpu.reciprocal %6 : vector<3x128xf32> -> vector<3x128xf32>
    %cst_1 = arith.constant -1.000000e+00 : f32
    %8 = vector.broadcast %cst_1 : f32 to vector<3x128xf32>
    %9 = arith.subf %8, %1 : vector<3x128xf32>
    %10 = arith.mulf %9, %7 : vector<3x128xf32>
    %cst_2 = arith.constant 1.000000e+00 : f32
    %11 = vector.broadcast %cst_2 : f32 to vector<3x128xf32>
    %12 = arith.subf %11, %1 : vector<3x128xf32>
    %13 = arith.mulf %12, %7 : vector<3x128xf32>
    %14 = arith.minimumf %10, %13 : vector<3x128xf32>
    %cst_3 = arith.constant dense<0xFF800000> : vector<128xf32>
    %15 = vector.multi_reduction <maximumf>, %14, %cst_3 [0] : vector<3x128xf32> to vector<128xf32>
    %16 = vector.shape_cast %15 : vector<128xf32> to vector<1x128xf32>
    %17 = arith.maximumf %10, %13 : vector<3x128xf32>
    %cst_4 = arith.constant dense<0x7F800000> : vector<128xf32>
    %18 = vector.multi_reduction <minimumf>, %17, %cst_4 [0] : vector<3x128xf32> to vector<128xf32>
    %19 = vector.shape_cast %18 : vector<128xf32> to vector<1x128xf32>
    %20 = arith.cmpf olt, %19, %16 : vector<1x128xf32>
    %cst_5 = arith.constant 1.000000e+09 : f32
    %21 = vector.broadcast %cst_5 : f32 to vector<1x128xf32>
    %22 = arith.select %20, %21, %16 : vector<1x128xi1>, vector<1x128xf32>
    %cst_6 = arith.constant 1.000000e+09 : f32
    %23 = vector.broadcast %cst_6 : f32 to vector<1x128xf32>
    %24 = arith.select %20, %23, %19 : vector<1x128xi1>, vector<1x128xf32>
    %cst_7 = arith.constant 5.000000e-02 : f32
    %25 = vector.broadcast %cst_7 : f32 to vector<1x128xf32>
    %26 = arith.maximumf %22, %25 : vector<1x128xf32>
    %27 = arith.subf %4, %26 : vector<1x128xf32>
    %28 = arith.subf %24, %26 : vector<1x128xf32>
    %29 = tpu.reciprocal %28 : vector<1x128xf32> -> vector<1x128xf32>
    %30 = arith.mulf %27, %29 : vector<1x128xf32>
    %cst_8 = arith.constant 1.000000e+00 : f32
    %31 = vector.broadcast %cst_8 : f32 to vector<1x128xf32>
    %32 = arith.subf %31, %3 : vector<1x128xf32>
    %c0_9 = arith.constant 0 : index
    %c0_10 = arith.constant 0 : index
    %33 = vector.load %arg2[%c0_9, %c0_10] : memref<3x128xf32, #tpu.memory_space<vmem>>, vector<3x128xf32>
    %34 = vector.extract_strided_slice %33 {offsets = [0, 0], sizes = [1, 128], strides = [1, 1]} : vector<3x128xf32> to vector<1x128xf32>
    %c0_11 = arith.constant 0 : index
    %35 = memref.load %arg3[%c0_11] : memref<3xf32, #tpu.memory_space<smem>>
    %36 = vector.broadcast %35 : f32 to vector<1x128xf32>
    %37 = arith.mulf %32, %36 : vector<1x128xf32>
    %38 = arith.addf %34, %37 : vector<1x128xf32>
    %39 = vector.extract_strided_slice %33 {offsets = [1, 0], sizes = [1, 128], strides = [1, 1]} : vector<3x128xf32> to vector<1x128xf32>
    %c1 = arith.constant 1 : index
    %40 = memref.load %arg3[%c1] : memref<3xf32, #tpu.memory_space<smem>>
    %41 = vector.broadcast %40 : f32 to vector<1x128xf32>
    %42 = arith.mulf %32, %41 : vector<1x128xf32>
    %43 = arith.addf %39, %42 : vector<1x128xf32>
    %44 = vector.extract_strided_slice %33 {offsets = [2, 0], sizes = [1, 128], strides = [1, 1]} : vector<3x128xf32> to vector<1x128xf32>
    %c2 = arith.constant 2 : index
    %45 = memref.load %arg3[%c2] : memref<3xf32, #tpu.memory_space<smem>>
    %46 = vector.broadcast %45 : f32 to vector<1x128xf32>
    %47 = arith.mulf %32, %46 : vector<1x128xf32>
    %48 = arith.addf %44, %47 : vector<1x128xf32>
    %49 = tpu.concatenate %30, %38, %43, %48 in 0 : vector<1x128xf32>, vector<1x128xf32>, vector<1x128xf32>, vector<1x128xf32> -> vector<4x128xf32>
    %c0_12 = arith.constant 0 : index
    %c0_13 = arith.constant 0 : index
    %50 = vector.load %arg4[%c0_12, %c0_13] : memref<4x128xf32, #tpu.memory_space<vmem>>, vector<4x128xf32>
    tpu.vector_store %arg4[%c0_12, %c0_13], %49 {strides = array<i32>} : memref<4x128xf32, #tpu.memory_space<vmem>>, vector<4x128xf32>,
    return
  }
  func.func @transform_0(%arg0: i32) -> (i32, i32) {
    %c0_i32 = arith.constant 0 : i32
    %c0_i32_0 = arith.constant 0 : i32
    return %c0_i32, %arg0 : i32, i32
  }
  func.func @transform_1(%arg0: i32) -> (i32, i32) {
    %c0_i32 = arith.constant 0 : i32
    %c0_i32_0 = arith.constant 0 : i32
    return %c0_i32, %arg0 : i32, i32
  }
  func.func @transform_2(%arg0: i32) -> i32 {
    %c0_i32 = arith.constant 0 : i32
    %c0_i32_0 = arith.constant 0 : i32
    return %c0_i32 : i32
  }
  func.func @transform_3(%arg0: i32) -> (i32, i32) {
    %c0_i32 = arith.constant 0 : i32
    %c0_i32_0 = arith.constant 0 : i32
    return %c0_i32, %arg0 : i32, i32
  }
}

</mosaic_0001>

<llo_original>
// kernel: squeeze.1
$region0: #{squeeze.1}
  %s0 = inlined_call_operand.vmem [shape: f32[32], index: 0, kind: input, shape index: {}]
  %s1 = inlined_call_operand.hbm [shape: f32[2,16], index: 1, kind: output, shape index: {}]
  $region1: #{squeeze.1} parent=0
    #allocation0 [shape = 'u8[1024]{0}', space=vmem, size = 0x400, scoped, tag = 'operand span for operand 1']
    #allocation1 [shape = 's32[1]{0}', space=sflag, size = 0x4, scoped, tag = 'scoped memory for squeeze.1']
    #allocation2 [shape = 'u8[4096]{0}', space=vmem, size = 0x1000, scoped, tag = 'scoped mem for output reshape']
    #allocation3 [shape = 'u8[4096]{0}', space=vmem, size = 0x1000, scoped, tag = 'scoped mem for input reshape']
    %2 = vsyncpa [#allocation1], 0
    %s4 = sshll.u32 1, 1
    %s5 = ssub.s32 %s4, 1
    %v6 = vld [vmem:[%s0] sm:%s5]
    %7 = vst [vmem:[#allocation3] sm:%s5] %v6
    %v8 = vld [vmem:[#allocation3] sm:$0x1]
    %vm9 = vcmask 130048
    %10 = vst.msk [vmem:[#allocation2] sm:$0x1] %vm9, %v8
    %v11 = vld [vmem:[#allocation3] sm:$0x1]
    %12 = vrot.lane.b32.xlu0 %v11, 112
    %v13 = vpop.permute.xlu0 %12
    %vm14 = vcmask 130048
    %s15 = scalar_lea.vmem [#allocation2], 1
    %16 = vst.msk [vmem:[%s15] sm:$0x1] %vm14, %v13
    %s18 = sshll.u32 1, 2
    %s19 = ssub.s32 %s18, 1
    %v21 = vld [vmem:[#allocation2] sm:%s19]
    %s22 = sshll.u32 1, 2
    %s23 = ssub.s32 %s22, 1
    %24 = vst [vmem:[#allocation0] sm:%s23] %v21
    %s26 = ssub.s32 32, 32
    %27 = vsyncadd [#allocation1], %s26
    %s29 = sshll.u32 [#allocation0], 4
    %s30 = int_to_ptr.vmem [resolvable:$true] %s29
    %32 = dma.vmem_to_hbm [thread:$0]  %s30, 32, %s1, [#allocation1]
    %33 = dma.done [#allocation1], 32
    %34 = vsyncpa [#allocation1], 1

// kernel: nerf_render_finalize.1
$region0: #{nerf_render_finalize.1}
  #allocation0 [shape = 'u32[]', space=smem, size = 0x4, offset = 0x4, fixed_abs, tag = 'smem constant byte address 0x4 - core index']
  #allocation1 [shape = 'u32[144,128]{1,0:T(1,128)}', space=vmem, size = 0x12000, scoped, tag = 'internal scratch']
  %s0 = inlined_call_operand.vmem [shape: f32[8,256], index: 0, kind: input, shape index: {}]
  %s1 = inlined_call_operand.vmem [shape: f32[3,256], index: 1, kind: input, shape index: {}]
  %s2 = inlined_call_operand.vmem [shape: f32[3], index: 2, kind: input, shape index: {}]
  %s3 = inlined_call_operand.vmem [shape: f32[4,256], index: 3, kind: output, shape index: {}]
  %s4 = sld [smem:[#allocation0]]
  $region49: #{nerf_render_finalize.1} parent=0
    _
  %s6 = ssub.s32 1, %s4
  %s7 = scalar_select 0, %s6, %s4
  $region1: #{nerf_render_finalize.1} parent=0
    #allocation2 [shape = 'u8[512]{0}', space=smem, size = 0x200, scoped, tag = 'input window, operand 2, single buffered']
    #allocation3 [shape = 's32[2]{0}', space=sflag, size = 0x8, scoped, tag = 'scoped memory for nerf_render_finalize.1']
    %8 = vsyncpa [#allocation3], 0
    loop: start=0, step=1, limit=4
    $region2: #{nerf_render_finalize.1} parent=1 // loop_pre_header
      _
    $region3: #{nerf_render_finalize.1} parent=1 // loop_header
      %s10 = sphi 0, %s14
      %p11 = scmp.ge.s32.totalorder %s10, 4
      %s20 = sphi 0, %s22
      %s23 = sphi 0, %s20
      %s24 = sphi 0, %s23
      %s40 = sphi 0, %s24
      %s46 = sphi 0, %s48
      %s49 = sphi 0, %s46
      %s50 = sphi 0, %s49
      %s66 = sphi 0, %s50
      %s70 = sphi 0, %s70
      %s72 = sphi 0, %s70
      %s73 = sphi 0, %s72
      %s87 = sphi 0, %s73
      %s93 = sphi 0, %s95
      %s96 = sphi 0, %s93
      %s97 = sphi 0, %s96
      %s113 = sphi 0, %s97
    $region4: #{nerf_render_finalize.1} parent=1 // loop_header_branch
      %13 = sbr.rel (%p11) target = $region8
    $region5: #{nerf_render_finalize.1} parent=1 // loop_body
      %s15 = ssub.s32 %s10, 1
      %s16 = ssub.s32 %s10, 2
      %s17 = sadd.s32 %s10, 1
      %s18 = ssub.s32 %s10, %s17
      %p19 = scmp.eq.s32.totalorder %s18, 0
      %s21 = sadd.s32 %s20, 1
      %s22 = scalar_select %p19, %s20, %s21
      %p25 = pneg %p19
      %p26 = scmp.eq.s32.totalorder %s10, 1
      %p27 = por %p25, %p26
      %p28 = scmp.ne.s32.totalorder %s20, %s23
      %p29 = scmp.eq.s32.totalorder %s10, 0
      %p30 = por %p28, %p29
      %p31 = scmp.ne.s32.totalorder %s20, %s23
      %p32 = scmp.eq.s32.totalorder %s15, 1
      %p33 = por %p31, %p32
      %p34 = scmp.ne.s32.totalorder %s23, %s24
      %p35 = scmp.eq.s32.totalorder %s15, 0
      %p36 = por %p34, %p35
      %p37 = scmp.ne.s32.totalorder %s23, %s24
      %p38 = scmp.eq.s32.totalorder %s16, 1
      %p39 = por %p37, %p38
      %p41 = scmp.ne.s32.totalorder %s24, %s40
      %p42 = scmp.eq.s32.totalorder %s16, 0
      %p43 = por %p41, %p42
      %s44 = ssub.s32 %s10, %s17
      %p45 = scmp.eq.s32.totalorder %s44, 0
      %s47 = sadd.s32 %s46, 1
      %s48 = scalar_select %p45, %s46, %s47
      %p51 = pneg %p45
      %p52 = scmp.eq.s32.totalorder %s10, 1
      %p53 = por %p51, %p52
      %p54 = scmp.ne.s32.totalorder %s46, %s49
      %p55 = scmp.eq.s32.totalorder %s10, 0
      %p56 = por %p54, %p55
      %p57 = scmp.ne.s32.totalorder %s46, %s49
      %p58 = scmp.eq.s32.totalorder %s15, 1
      %p59 = por %p57, %p58
      %p60 = scmp.ne.s32.totalorder %s49, %s50
      %p61 = scmp.eq.s32.totalorder %s15, 0
      %p62 = por %p60, %p61
      %p63 = scmp.ne.s32.totalorder %s49, %s50
      %p64 = scmp.eq.s32.totalorder %s16, 1
      %p65 = por %p63, %p64
      %p67 = scmp.ne.s32.totalorder %s50, %s66
      %p68 = scmp.eq.s32.totalorder %s16, 0
      %p69 = por %p67, %p68
      %s71 = sadd.s32 %s70, 1
      %p74 = scmp.eq.s32.totalorder %s10, 1
      %p75 = scmp.ne.s32.totalorder %s70, %s72
      %p76 = scmp.eq.s32.totalorder %s10, 0
      %p77 = por %p75, %p76
      %p78 = scmp.ne.s32.totalorder %s70, %s72
      %p79 = scmp.eq.s32.totalorder %s15, 1
      %p80 = por %p78, %p79
      %p81 = scmp.ne.s32.totalorder %s72, %s73
      %p82 = scmp.eq.s32.totalorder %s15, 0
      %p83 = por %p81, %p82
      %p84 = scmp.ne.s32.totalorder %s72, %s73
      %p85 = scmp.eq.s32.totalorder %s16, 1
      %p86 = por %p84, %p85
      %p88 = scmp.ne.s32.totalorder %s73, %s87
      %p89 = scmp.eq.s32.totalorder %s16, 0
      %p90 = por %p88, %p89
      %s91 = ssub.s32 %s10, %s17
      %p92 = scmp.eq.s32.totalorder %s91, 0
      %s94 = sadd.s32 %s93, 1
      %s95 = scalar_select %p92, %s93, %s94
      %p98 = pneg %p92
      %p99 = scmp.eq.s32.totalorder %s10, 1
      %p100 = por %p98, %p99
      %p101 = scmp.ne.s32.totalorder %s93, %s96
      %p102 = scmp.eq.s32.totalorder %s10, 0
      %p103 = por %p101, %p102
      %p104 = scmp.ne.s32.totalorder %s93, %s96
      %p105 = scmp.eq.s32.totalorder %s15, 1
      %p106 = por %p104, %p105
      %p107 = scmp.ne.s32.totalorder %s96, %s97
      %p108 = scmp.eq.s32.totalorder %s15, 0
      %p109 = por %p107, %p108
      %p110 = scmp.ne.s32.totalorder %s96, %s97
      %p111 = scmp.eq.s32.totalorder %s16, 1
      %p112 = por %p110, %p111
      %p114 = scmp.ne.s32.totalorder %s97, %s113
      %p115 = scmp.eq.s32.totalorder %s16, 0
      %p116 = por %p114, %p115
      %p117 = scmp.le.s32.totalorder 1, %s10
      %p118 = scmp.lt.s32.totalorder %s10, 3
      %p119 = pnand %p117, %p118
      %p120 = pneg %p119
      // Predicated region
      $region9: #{nerf_render_finalize.1} parent=5 // pred_check
        _
      $region10: #{nerf_render_finalize.1} parent=5 // pred_check_branch
        %122 = sbr.rel (%p119) target = $region12
      $region11: #{nerf_render_finalize.1} parent=5 // pred_region
        %s123 = ssub.s32 %s10, 1
        // Predicated region
        $region13: #{nerf_render_finalize.1} parent=11 // pred_check
          %p124 = pneg %p83
        $region14: #{nerf_render_finalize.1} parent=11 // pred_check_branch
          %126 = sbr.rel (%p124) target = $region16
        $region15: #{nerf_render_finalize.1} parent=11 // pred_region
          %s128 = ssub.s32 16, 16
          %129 = vsyncadd [#allocation3], %s128
          %s131 = sshll.u32 %s2, 4
          %s132 = int_to_ptr.vmem [resolvable:$true] %s131
          %134 = dma.vmem_to_smem %s132, 16, [#allocation2], [#allocation3]
        $region16: #{nerf_render_finalize.1} parent=11 // pred_fallthru
          _
      $region12: #{nerf_render_finalize.1} parent=5 // pred_fallthru
        _
      %p135 = scmp.lt.s32.totalorder %s10, 2
      // Predicated region
      $region17: #{nerf_render_finalize.1} parent=5 // pred_check
        %p136 = pneg %p135
      $region18: #{nerf_render_finalize.1} parent=5 // pred_check_branch
        %138 = sbr.rel (%p136) target = $region20
      $region19: #{nerf_render_finalize.1} parent=5 // pred_region
        // Predicated region
        $region21: #{nerf_render_finalize.1} parent=19 // pred_check
          %p139 = pneg %p30
        $region22: #{nerf_render_finalize.1} parent=19 // pred_check_branch
          %141 = sbr.rel (%p139) target = $region24
        $region23: #{nerf_render_finalize.1} parent=19 // pred_region
          %p142 = scmp.lt.s32.totalorder %s10, 1
          %s143 = scalar_select %p142, %s10, 1
          %s144 = smul.addr %s143, 8
          %s145 = scalar_lea.vmem %s0, %s144
        $region24: #{nerf_render_finalize.1} parent=19 // pred_fallthru
          _
        // Predicated region
        $region25: #{nerf_render_finalize.1} parent=19 // pred_check
          %p146 = pneg %p56
        $region26: #{nerf_render_finalize.1} parent=19 // pred_check_branch
          %148 = sbr.rel (%p146) target = $region28
        $region27: #{nerf_render_finalize.1} parent=19 // pred_region
          %p149 = scmp.lt.s32.totalorder %s10, 1
          %s150 = scalar_select %p149, %s10, 1
          %s151 = smul.addr %s150, 4
          %s152 = scalar_lea.vmem %s1, %s151
        $region28: #{nerf_render_finalize.1} parent=19 // pred_fallthru
          _
      $region20: #{nerf_render_finalize.1} parent=5 // pred_fallthru
        _
      %p153 = scmp.le.s32.totalorder 1, %s10
      %p154 = scmp.lt.s32.totalorder %s10, 3
      %p155 = pnand %p153, %p154
      %p156 = pneg %p155
      // Predicated region
      $region29: #{nerf_render_finalize.1} parent=5 // pred_check
        _
      $region30: #{nerf_render_finalize.1} parent=5 // pred_check_branch
        %158 = sbr.rel (%p155) target = $region32
      $region31: #{nerf_render_finalize.1} parent=5 // pred_region
        %s159 = ssub.s32 %s10, 1
        // Predicated region
        $region33: #{nerf_render_finalize.1} parent=31 // pred_check
          %p160 = pneg %p83
        $region34: #{nerf_render_finalize.1} parent=31 // pred_check_branch
          %162 = sbr.rel (%p160) target = $region36
        $region35: #{nerf_render_finalize.1} parent=31 // pred_region
          %163 = dma.done [#allocation3], 16
        $region36: #{nerf_render_finalize.1} parent=31 // pred_fallthru
          _
        %164 = sfence
        %p165 = scmp.lt.s32.totalorder %s15, 1
        %s166 = scalar_select %p165, %s15, 1
        %s167 = smul.addr %s166, 8
        %s168 = scalar_lea.vmem %s0, %s167
        %p169 = pneg %p36
        %p170 = pneg %p33
        %p171 = scmp.lt.s32.totalorder %s15, 1
        %s172 = scalar_select %p171, %s15, 1
        %s173 = smul.addr %s172, 4
        %s174 = scalar_lea.vmem %s1, %s173
        %p175 = pneg %p62
        %p176 = pneg %p59
        %p177 = pneg %p83
        %p178 = pneg %p80
        %p179 = pneg %p109
        %p180 = pneg %p106
        %p181 = scmp.lt.s32.totalorder %s15, 1
        %s182 = scalar_select %p181, %s15, 1
        %s183 = smul.addr %s182, 4
        %s184 = scalar_lea.vmem %s3, %s183
        %p185 = scmp.lt.s32.totalorder %s15, 1
        %s186 = scalar_select %p185, %s15, 1
        %s187 = smul.addr %s186, 8
        %s188 = scalar_lea.vmem %s0, %s187
        %p189 = scmp.lt.s32.totalorder %s15, 1
        %s190 = scalar_select %p189, %s15, 1
        %s191 = smul.addr %s190, 4
        %s192 = scalar_lea.vmem %s1, %s191
        %p193 = scmp.lt.s32.totalorder %s15, 1
        %s194 = scalar_select %p193, %s15, 1
        %s195 = smul.addr %s194, 4
        %s196 = scalar_lea.vmem %s3, %s195
        %v197 = vld [vmem:[%s188] sm:$0xff]
        %v198 = vadd.f32 %v197, 1e-15
        %v199 = vrcp.pop %v198
        %v200 = vsub.f32 -1.0, %v197
        %v202 = vrot.slane %v199, 3
        %v204 = vmul.f32 %v200, %v202
        %v205 = vsub.f32 1.0, %v197
        %v206 = vmul.f32 %v205, %v202
        %v207 = vmin.f32 %v204, %v206
        %vm208 = vcmask 1042432
        %v209 = vsel %vm208, %v207, -inf
        %v210 = vrot.slane %v209, 4
        %v211 = vmax.f32 %v209, %v210
        %v212 = vrot.slane %v211, 2
        %v213 = vmax.f32 %v211, %v212
        %v214 = vrot.slane %v213, 1
        %v215 = vmax.f32 %v213, %v214
        %v216 = vmax.f32 %v204, %v206
        %v217 = vsel %vm208, %v216, inf
        %v218 = vrot.slane %v217, 4
        %v219 = vmin.f32 %v217, %v218
        %v220 = vrot.slane %v219, 2
        %v221 = vmin.f32 %v219, %v220
        %v222 = vrot.slane %v221, 1
        %v223 = vmin.f32 %v221, %v222
        %vm224 = vcmp.lt.f32.partialorder %v223, %v215
        %v225 = vsel %vm224, 1e+09, %v215
        %v226 = vsel %vm224, 1e+09, %v223
        %v227 = vmax.f32 %v225, 0.05
        %v228 = vsub.f32 %v197, %v227
        %v229 = vsub.f32 %v226, %v227
        %v230 = vrcp.pop %v229
        %v231 = vmul.f32 %v228, %v230
        %v232 = vld [vmem:[%s192] sm:$0x7]
        %s233 = sld [smem:[#allocation2]]
        %v234 = vstv %s233
        %v235 = vmul.f32 %v205, %v234
        %v237 = vrot.slane %v235, 6
        %v239 = vadd.f32 %v232, %v237
        %s240 = sld [smem:[#allocation2 + $0x1]]
        %v241 = vstv %s240
        %v242 = vmul.f32 %v205, %v241
        %v244 = vrot.slane %v242, 5
        %v246 = vadd.f32 %v232, %v244
        %s247 = sld [smem:[#allocation2 + $0x2]]
        %v248 = vstv %s247
        %v249 = vmul.f32 %v205, %v248
        %v251 = vrot.slane %v249, 4
        %v253 = vadd.f32 %v232, %v251
        %v255 = vrot.slane %v231, 7
        %v258 = vrot.slane %v239, 7
        %v261 = vrot.slane %v246, 7
        %v264 = vrot.slane %v253, 7
        %vm266 = vcmask 1040384
        %v267 = vsel %vm266, %v255, %v258
        %vm268 = vcmask 1041408
        %v269 = vsel %vm268, %v267, %v261
        %v270 = vsel %vm208, %v269, %v264
        %271 = vst [vmem:[%s196] sm:$0xf] %v270
        %p272 = scmp.lt.s32.totalorder %s15, 1
        %s273 = scalar_select %p272, %s15, 1
        %s274 = smul.addr %s273, 4
        %s275 = scalar_lea.vmem %s3, %s274
        // Predicated region
        $region37: #{nerf_render_finalize.1} parent=31 // pred_check
          %p276 = pneg %p106
        $region38: #{nerf_render_finalize.1} parent=31 // pred_check_branch
          %278 = sbr.rel (%p276) target = $region40
        $region39: #{nerf_render_finalize.1} parent=31 // pred_region
          _
        $region40: #{nerf_render_finalize.1} parent=31 // pred_fallthru
          _
      $region32: #{nerf_render_finalize.1} parent=5 // pred_fallthru
        _
      %p279 = scmp.le.s32.totalorder 2, %s10
      // Predicated region
      $region41: #{nerf_render_finalize.1} parent=5 // pred_check
        %p280 = pneg %p279
      $region42: #{nerf_render_finalize.1} parent=5 // pred_check_branch
        %282 = sbr.rel (%p280) target = $region44
      $region43: #{nerf_render_finalize.1} parent=5 // pred_region
        %s283 = ssub.s32 %s10, 2
        // Predicated region
        $region45: #{nerf_render_finalize.1} parent=43 // pred_check
          %p284 = pneg %p112
        $region46: #{nerf_render_finalize.1} parent=43 // pred_check_branch
          %286 = sbr.rel (%p284) target = $region48
        $region47: #{nerf_render_finalize.1} parent=43 // pred_region
          %p287 = scmp.lt.s32.totalorder %s16, 1
          %s288 = scalar_select %p287, %s16, 1
          %s289 = smul.addr %s288, 4
          %s290 = scalar_lea.vmem %s3, %s289
        $region48: #{nerf_render_finalize.1} parent=43 // pred_fallthru
          _
      $region44: #{nerf_render_finalize.1} parent=5 // pred_fallthru
        _
    $region6: #{nerf_render_finalize.1} parent=1 // loop_footer
      %s14 = sadd.s32 1, %s10
    $region7: #{nerf_render_finalize.1} parent=1 // loop_footer_branch
      %9 = sbr.rel target = $region3
    $region8: #{nerf_render_finalize.1} parent=1 // loop_exit
      _
    %291 = vsyncpa [#allocation3], 1
    %s292 = scalar_lea.sflag [#allocation3], 1
    %293 = vsyncpa %s292, 1

</llo_original>
